<compile_context>
chip_gen: v7x
topology: tpu7x:2x2x1
jax: 0.10.0
libtpu: 0.0.40
codegen_flags: <defaults>
</compile_context>

<pallas_src>
import jax
import jax.numpy as jnp
from jax.experimental import pallas as pl
from jax.experimental.pallas import tpu as pltpu


def _round_up(x, m):
    return (x + m - 1) // m * m


def _generator_kernel(x_ref, w1_ref, b1_ref, w2_ref, b2_ref, w3_ref, b3_ref,
                      o_ref):
    # Layer 1: Linear(128->256, zero-padded K) + ReLU  (bf16 in, f32 acc)
    h1 = jnp.dot(x_ref[...], w1_ref[...], preferred_element_type=jnp.float32)
    h1 = jnp.maximum(h1 + b1_ref[...], 0.0).astype(jnp.bfloat16)
    # Layer 2: Linear(256->256) + ReLU
    h2 = jnp.dot(h1, w2_ref[...], preferred_element_type=jnp.float32)
    h2 = jnp.maximum(h2 + b2_ref[...], 0.0).astype(jnp.bfloat16)
    # Layer 3: Linear(256->784) + Tanh (f32 math, bf16 store)
    h3 = jnp.dot(h2, w3_ref[...], preferred_element_type=jnp.float32)
    o_ref[...] = jnp.tanh(h3 + b3_ref[...]).astype(o_ref.dtype)


def prepare_params(params):
    """One-time padding + bf16 cast of the weights (hoisted out of forward)."""
    w1, b1, w2, b2, w3, b3 = params
    K, N1 = w1.shape
    K_pad = _round_up(K, 128)  # 100 -> 128 (lane-aligned contraction dim)
    w1_p = jnp.zeros((K_pad, N1), jnp.bfloat16).at[:K, :].set(
        w1.astype(jnp.bfloat16))
    w2_p = w2.astype(jnp.bfloat16)
    w3_p = w3.astype(jnp.bfloat16)            # (256, 784) — no N padding
    b1_p = b1.astype(jnp.float32).reshape(1, -1)
    b2_p = b2.astype(jnp.float32).reshape(1, -1)
    b3_p = b3.astype(jnp.float32).reshape(1, -1)
    return (K, w1_p, b1_p, w2_p, b2_p, w3_p, b3_p)


def generator_forward(x, prepared, *, block_m=1024):
    """x: [B, 100] float32 -> [B, 784] bfloat16."""
    K_logical, w1_p, b1_p, w2_p, b2_p, w3_p, b3_p = prepared
    B, K = x.shape
    assert K == K_logical, (K, K_logical)
    K_pad, N1 = w1_p.shape
    N2 = w2_p.shape[1]
    N3 = w3_p.shape[1]

    # Batch tiling: tiles of <= block_m rows (multiple of 8 sublanes), and at
    # least 2 grid blocks when the batch allows it so the "parallel" axis can
    # shard across both TensorCores on v7x.
    n_blocks = max(2, 2 * pl.cdiv(B, 2 * block_m))
    TM = min(block_m, _round_up(pl.cdiv(B, n_blocks), 8))
    B_pad = _round_up(B, TM)
    nb = B_pad // TM

    # Per-call input padding + bf16 cast (input changes every call; weights do
    # not — they were prepared once in prepare_params()).
    x_p = jnp.zeros((B_pad, K_pad), jnp.bfloat16)
    x_p = x_p.at[:B, :K].set(x.astype(jnp.bfloat16))

    full = lambda shape: pl.BlockSpec(shape, lambda i: (0,) * len(shape))

    flops = 2 * B_pad * (K_pad * N1 + N1 * N2 + N2 * N3)
    bytes_accessed = (x_p.size * 2
                      + (w1_p.size + w2_p.size + w3_p.size) * 2
                      + (b1_p.size + b2_p.size + b3_p.size) * 4
                      + B_pad * N3 * 2)

    out = pl.pallas_call(
        _generator_kernel,
        out_shape=jax.ShapeDtypeStruct((B_pad, N3), jnp.bfloat16),
        grid_spec=pltpu.PrefetchScalarGridSpec(
            num_scalar_prefetch=0,
            grid=(nb,),
            in_specs=[
                pl.BlockSpec((TM, K_pad), lambda i: (i, 0)),   # x: batch-tiled
                full(w1_p.shape), full(b1_p.shape),            # weights: resident
                full(w2_p.shape), full(b2_p.shape),
                full(w3_p.shape), full(b3_p.shape),
            ],
            out_specs=pl.BlockSpec((TM, N3), lambda i: (i, 0)),
        ),
        compiler_params=pltpu.CompilerParams(
            dimension_semantics=("parallel",),
            vmem_limit_bytes=48 * 1024 * 1024,
        ),
        cost_estimate=pl.CostEstimate(
            flops=flops,
            transcendentals=B_pad * N3,
            bytes_accessed=bytes_accessed,
        ),
    )(x_p, w1_p, b1_p, w2_p, b2_p, w3_p, b3_p)

    # squeeze(-1) is a no-op for [B, 784].  Only slice when batch padding was
    # actually added (padded rows are NOT zero: bias propagates through the
    # MLP, so they must not be consumed downstream).
    if B_pad != B:
        out = out[:B]
    return out


def init_params(key):
    k1, k2, k3, k4, k5, k6 = jax.random.split(key, 6)

    # Deterministic synthetic init (uniform, roughly PyTorch Linear scale).
    def lin(kw, kb, fan_in, fan_out):
        bound = 1.0 / jnp.sqrt(fan_in)
        w = jax.random.uniform(kw, (fan_in, fan_out), jnp.float32, -bound, bound)
        b = jax.random.uniform(kb, (1, fan_out), jnp.float32, -bound, bound)
        return w, b

    w1, b1 = lin(k1, k2, 100, 256)
    w2, b2 = lin(k3, k4, 256, 256)
    w3, b3 = lin(k5, k6, 256, 784)
    return (w1, b1, w2, b2, w3, b3)


def reference_forward(x, params):
    w1, b1, w2, b2, w3, b3 = params
    h = jnp.maximum(x @ w1 + b1, 0.0)
    h = jnp.maximum(h @ w2 + b2, 0.0)
    return jnp.tanh(h @ w3 + b3)


if __name__ == "__main__":
    key = jax.random.PRNGKey(0)
    kx, kp = jax.random.split(key)

    B = 8
    x = jax.random.normal(kx, (B, 100), jnp.float32)
    params = init_params(kp)
    prepared = prepare_params(params)   # one-time weight padding / bf16 cast

    out = generator_forward(x, prepared)
    out = jax.block_until_ready(out)

    ref = reference_forward(x, params)
    assert out.shape == (B, 784), out.shape
    assert out.dtype == jnp.bfloat16, out.dtype
    # bf16 matmul inputs + bf16 output (tanh range [-1, 1]) vs f32 reference.
    err = float(jnp.max(jnp.abs(out.astype(jnp.float32) - ref)))
    assert err < 5e-2, "mismatch vs reference: max abs err = %f" % err

    print("KERNEL_OK")
</pallas_src>

<mosaic_0001>
module attributes {stable_mosaic.version = 11 : i64} {
  func.func @_generator_kernel(%arg0: i32, %arg1: memref<8x128xbf16, #tpu.memory_space<vmem>>, %arg2: memref<128x256xbf16, #tpu.memory_space<vmem>>, %arg3: memref<1x256xf32, #tpu.memory_space<vmem>>, %arg4: memref<256x256xbf16, #tpu.memory_space<vmem>>, %arg5: memref<1x256xf32, #tpu.memory_space<vmem>>, %arg6: memref<256x784xbf16, #tpu.memory_space<vmem>>, %arg7: memref<1x784xf32, #tpu.memory_space<vmem>>, %arg8: memref<8x784xbf16, #tpu.memory_space<vmem>>) attributes {dimension_semantics = [#tpu.dimension_semantics<parallel>], iteration_bounds = array<i64: 1>, scalar_prefetch = 0 : i64, scratch_operands = 0 : i64, tpu.core_type = #tpu.core_type<tc>, window_params = [{transform_indices = @transform_0, window_bounds = array<i64: 8, 128>}, {pipeline_mode = #tpu.pipeline_mode<synchronous>, transform_indices = @transform_1, window_bounds = array<i64: 128, 256>}, {pipeline_mode = #tpu.pipeline_mode<synchronous>, transform_indices = @transform_2, window_bounds = array<i64: 1, 256>}, {pipeline_mode = #tpu.pipeline_mode<synchronous>, transform_indices = @transform_3, window_bounds = array<i64: 256, 256>}, {pipeline_mode = #tpu.pipeline_mode<synchronous>, transform_indices = @transform_4, window_bounds = array<i64: 1, 256>}, {pipeline_mode = #tpu.pipeline_mode<synchronous>, transform_indices = @transform_5, window_bounds = array<i64: 256, 784>}, {pipeline_mode = #tpu.pipeline_mode<synchronous>, transform_indices = @transform_6, window_bounds = array<i64: 1, 784>}, {transform_indices = @transform_7, window_bounds = array<i64: 8, 784>}]} {
    %c0 = arith.constant 0 : index
    %c0_0 = arith.constant 0 : index
    %0 = vector.load %arg1[%c0, %c0_0] : memref<8x128xbf16, #tpu.memory_space<vmem>>, vector<8x128xbf16>
    %c0_1 = arith.constant 0 : index
    %c0_2 = arith.constant 0 : index
    %1 = vector.load %arg2[%c0_1, %c0_2] : memref<128x256xbf16, #tpu.memory_space<vmem>>, vector<128x256xbf16>
    %cst = arith.constant dense<0.000000e+00> : vector<8x256xf32>
    %2 = tpu.matmul %0, %1, %cst {dimension_numbers = #tpu.dot_dimension_numbers<[1], [0], [0], [1], [0, 0, 1, 1], [], []>} : vector<8x128xbf16>, vector<128x256xbf16>, vector<8x256xf32> -> vector<8x256xf32>
    %c0_3 = arith.constant 0 : index
    %c0_4 = arith.constant 0 : index
    %3 = vector.load %arg3[%c0_3, %c0_4] : memref<1x256xf32, #tpu.memory_space<vmem>>, vector<1x256xf32>
    %4 = vector.broadcast %3 : vector<1x256xf32> to vector<8x256xf32>
    %5 = arith.addf %2, %4 : vector<8x256xf32>
    %cst_5 = arith.constant 0.000000e+00 : f32
    %6 = vector.broadcast %cst_5 : f32 to vector<8x256xf32>
    %7 = arith.maximumf %5, %6 : vector<8x256xf32>
    %8 = arith.truncf %7 : vector<8x256xf32> to vector<8x256xbf16>
    %c0_6 = arith.constant 0 : index
    %c0_7 = arith.constant 0 : index
    %9 = vector.load %arg4[%c0_6, %c0_7] : memref<256x256xbf16, #tpu.memory_space<vmem>>, vector<256x256xbf16>
    %cst_8 = arith.constant dense<0.000000e+00> : vector<8x256xf32>
    %10 = tpu.matmul %8, %9, %cst_8 {dimension_numbers = #tpu.dot_dimension_numbers<[1], [0], [0], [1], [0, 0, 1, 1], [], []>} : vector<8x256xbf16>, vector<256x256xbf16>, vector<8x256xf32> -> vector<8x256xf32>
    %c0_9 = arith.constant 0 : index
    %c0_10 = arith.constant 0 : index
    %11 = vector.load %arg5[%c0_9, %c0_10] : memref<1x256xf32, #tpu.memory_space<vmem>>, vector<1x256xf32>
    %12 = vector.broadcast %11 : vector<1x256xf32> to vector<8x256xf32>
    %13 = arith.addf %10, %12 : vector<8x256xf32>
    %cst_11 = arith.constant 0.000000e+00 : f32
    %14 = vector.broadcast %cst_11 : f32 to vector<8x256xf32>
    %15 = arith.maximumf %13, %14 : vector<8x256xf32>
    %16 = arith.truncf %15 : vector<8x256xf32> to vector<8x256xbf16>
    %c0_12 = arith.constant 0 : index
    %c0_13 = arith.constant 0 : index
    %17 = vector.load %arg6[%c0_12, %c0_13] : memref<256x784xbf16, #tpu.memory_space<vmem>>, vector<256x784xbf16>
    %cst_14 = arith.constant dense<0.000000e+00> : vector<8x784xf32>
    %18 = tpu.matmul %16, %17, %cst_14 {dimension_numbers = #tpu.dot_dimension_numbers<[1], [0], [0], [1], [0, 0, 1, 1], [], []>} : vector<8x256xbf16>, vector<256x784xbf16>, vector<8x784xf32> -> vector<8x784xf32>
    %c0_15 = arith.constant 0 : index
    %c0_16 = arith.constant 0 : index
    %19 = vector.load %arg7[%c0_15, %c0_16] : memref<1x784xf32, #tpu.memory_space<vmem>>, vector<1x784xf32>
    %20 = vector.broadcast %19 : vector<1x784xf32> to vector<8x784xf32>
    %21 = arith.addf %18, %20 : vector<8x784xf32>
    %22 = math.tanh %21 : vector<8x784xf32>
    %23 = arith.truncf %22 : vector<8x784xf32> to vector<8x784xbf16>
    %c0_17 = arith.constant 0 : index
    %c0_18 = arith.constant 0 : index
    %24 = vector.load %arg8[%c0_17, %c0_18] : memref<8x784xbf16, #tpu.memory_space<vmem>>, vector<8x784xbf16>
    tpu.vector_store %arg8[%c0_17, %c0_18], %23 {strides = array<i32>} : memref<8x784xbf16, #tpu.memory_space<vmem>>, vector<8x784xbf16>,
    return
  }
  func.func @transform_0(%arg0: i32) -> (i32, i32) {
    %c0_i32 = arith.constant 0 : i32
    %c0_i32_0 = arith.constant 0 : i32
    return %arg0, %c0_i32 : i32, i32
  }
  func.func @transform_1(%arg0: i32) -> (i32, i32) {
    %c0_i32 = arith.constant 0 : i32
    %c0_i32_0 = arith.constant 0 : i32
    %c0_i32_1 = arith.constant 0 : i32
    return %c0_i32, %c0_i32_0 : i32, i32
  }
  func.func @transform_2(%arg0: i32) -> (i32, i32) {
    %c0_i32 = arith.constant 0 : i32
    %c0_i32_0 = arith.constant 0 : i32
    %c0_i32_1 = arith.constant 0 : i32
    return %c0_i32, %c0_i32_0 : i32, i32
  }
  func.func @transform_3(%arg0: i32) -> (i32, i32) {
    %c0_i32 = arith.constant 0 : i32
    %c0_i32_0 = arith.constant 0 : i32
    %c0_i32_1 = arith.constant 0 : i32
    return %c0_i32, %c0_i32_0 : i32, i32
  }
  func.func @transform_4(%arg0: i32) -> (i32, i32) {
    %c0_i32 = arith.constant 0 : i32
    %c0_i32_0 = arith.constant 0 : i32
    %c0_i32_1 = arith.constant 0 : i32
    return %c0_i32, %c0_i32_0 : i32, i32
  }
  func.func @transform_5(%arg0: i32) -> (i32, i32) {
    %c0_i32 = arith.constant 0 : i32
    %c0_i32_0 = arith.constant 0 : i32
    %c0_i32_1 = arith.constant 0 : i32
    return %c0_i32, %c0_i32_0 : i32, i32
  }
  func.func @transform_6(%arg0: i32) -> (i32, i32) {
    %c0_i32 = arith.constant 0 : i32
    %c0_i32_0 = arith.constant 0 : i32
    %c0_i32_1 = arith.constant 0 : i32
    return %c0_i32, %c0_i32_0 : i32, i32
  }
  func.func @transform_7(%arg0: i32) -> (i32, i32) {
    %c0_i32 = arith.constant 0 : i32
    %c0_i32_0 = arith.constant 0 : i32
    return %arg0, %c0_i32 : i32, i32
  }
}

</mosaic_0001>

<llo_original>
// kernel: tpu_custom_call.1
$region0: #{tpu_custom_call.1}
  #allocation0 [shape = 'u32[]', space=smem, size = 0x4, offset = 0x4, fixed_abs, tag = 'smem constant byte address 0x4 - core index']
  #allocation1 [shape = 'u32[144,128]{1,0:T(1,128)}', space=vmem, size = 0x12000, scoped, tag = 'internal scratch']
  %s0 = inlined_call_operand.vmem [shape: bf16[8,128], index: 0, kind: input, shape index: {}]
  %s1 = inlined_call_operand.vmem [shape: bf16[128,256], index: 1, kind: input, shape index: {}]
  %s2 = inlined_call_operand.vmem [shape: f32[1,256], index: 2, kind: input, shape index: {}]
  %s3 = inlined_call_operand.vmem [shape: bf16[256,256], index: 3, kind: input, shape index: {}]
  %s4 = inlined_call_operand.vmem [shape: f32[1,256], index: 4, kind: input, shape index: {}]
  %s5 = inlined_call_operand.vmem [shape: bf16[256,784], index: 5, kind: input, shape index: {}]
  %s6 = inlined_call_operand.vmem [shape: f32[1,784], index: 6, kind: input, shape index: {}]
  %s7 = inlined_call_operand.hbm [shape: bf16[8,784], index: 7, kind: output, shape index: {}]
  %s8 = sld [smem:[#allocation0]]
  $region38: #{tpu_custom_call.1} parent=0
    _
  %s10 = ssub.s32 1, %s8
  %s11 = scalar_select 0, %s10, %s8
  $region1: #{tpu_custom_call.1} parent=0
    #allocation2 [shape = 'u8[14336]{0}', space=vmem, size = 0x3800, scoped, tag = 'output window, operand 0, single buffered']
    #allocation3 [shape = 's32[1]{0}', space=sflag, size = 0x4, scoped, tag = 'scoped memory for tpu_custom_call.1']
    %12 = vsyncpa [#allocation3], 0
    // Predicated region
    $region2: #{tpu_custom_call.1} parent=1 // pred_check
      _
    $region3: #{tpu_custom_call.1} parent=1 // pred_check_branch
      %14 = sbr.rel (0) target = $region5
    $region4: #{tpu_custom_call.1} parent=1 // pred_region
      _
    $region5: #{tpu_custom_call.1} parent=1 // pred_fallthru
      _
    // Predicated region
    $region6: #{tpu_custom_call.1} parent=1 // pred_check
      _
    $region7: #{tpu_custom_call.1} parent=1 // pred_check_branch
      %16 = sbr.rel (0) target = $region9
    $region8: #{tpu_custom_call.1} parent=1 // pred_region
      _
    $region9: #{tpu_custom_call.1} parent=1 // pred_fallthru
      _
    // Predicated region
    $region10: #{tpu_custom_call.1} parent=1 // pred_check
      _
    $region11: #{tpu_custom_call.1} parent=1 // pred_check_branch
      %18 = sbr.rel (0) target = $region13
    $region12: #{tpu_custom_call.1} parent=1 // pred_region
      _
    $region13: #{tpu_custom_call.1} parent=1 // pred_fallthru
      _
    // Predicated region
    $region14: #{tpu_custom_call.1} parent=1 // pred_check
      _
    $region15: #{tpu_custom_call.1} parent=1 // pred_check_branch
      %20 = sbr.rel (0) target = $region17
    $region16: #{tpu_custom_call.1} parent=1 // pred_region
      _
    $region17: #{tpu_custom_call.1} parent=1 // pred_fallthru
      _
    // Predicated region
    $region18: #{tpu_custom_call.1} parent=1 // pred_check
      _
    $region19: #{tpu_custom_call.1} parent=1 // pred_check_branch
      %22 = sbr.rel (0) target = $region21
    $region20: #{tpu_custom_call.1} parent=1 // pred_region
      _
    $region21: #{tpu_custom_call.1} parent=1 // pred_fallthru
      _
    // Predicated region
    $region22: #{tpu_custom_call.1} parent=1 // pred_check
      _
    $region23: #{tpu_custom_call.1} parent=1 // pred_check_branch
      %24 = sbr.rel (0) target = $region25
    $region24: #{tpu_custom_call.1} parent=1 // pred_region
      _
    $region25: #{tpu_custom_call.1} parent=1 // pred_fallthru
      _
    // Predicated region
    $region26: #{tpu_custom_call.1} parent=1 // pred_check
      _
    $region27: #{tpu_custom_call.1} parent=1 // pred_check_branch
      %26 = sbr.rel (0) target = $region29
    $region28: #{tpu_custom_call.1} parent=1 // pred_region
      _
    $region29: #{tpu_custom_call.1} parent=1 // pred_fallthru
      _
    %v28 = vld [vmem:[%s0] sm:$0xf]
    %v29 = vld [vmem:[%s1] sm:$0xff]
    %v30 = vld [vmem:[%s1 + $0x8] sm:$0xff]
    %v31 = vld [vmem:[%s1 + $0x10] sm:$0xff]
    %v32 = vld [vmem:[%s1 + $0x18] sm:$0xff]
    %v33 = vld [vmem:[%s1 + $0x20] sm:$0xff]
    %v34 = vld [vmem:[%s1 + $0x28] sm:$0xff]
    %v35 = vld [vmem:[%s1 + $0x30] sm:$0xff]
    %v36 = vld [vmem:[%s1 + $0x38] sm:$0xff]
    %v37 = vld [vmem:[%s1 + $0x40] sm:$0xff]
    %v38 = vld [vmem:[%s1 + $0x48] sm:$0xff]
    %v39 = vld [vmem:[%s1 + $0x50] sm:$0xff]
    %v40 = vld [vmem:[%s1 + $0x58] sm:$0xff]
    %v41 = vld [vmem:[%s1 + $0x60] sm:$0xff]
    %v42 = vld [vmem:[%s1 + $0x68] sm:$0xff]
    %v43 = vld [vmem:[%s1 + $0x70] sm:$0xff]
    %v44 = vld [vmem:[%s1 + $0x78] sm:$0xff]
    %v45 = vld [vmem:[%s2] sm:$0x3]
    %v47 = vlaneseq
    %v48 = vshrl.u32 %v47, 7
    %v49 = vsub.s32 0, %v48
    %v50 = vrot.slane %v45, %v49
    %v51 = vlaneseq
    %v52 = vshrl.u32 %v51, 7
    %v53 = vsub.s32 1, %v52
    %v54 = vrot.slane %v45, %v53
    %v73 = vunpack.c.l.b16 %v29
    %v74 = vunpack.c.h.b16 %v29
    %v75 = vunpack.c.l.b16 %v30
    %v76 = vunpack.c.h.b16 %v30
    %v77 = vunpack.c.l.b16 %v31
    %v78 = vunpack.c.h.b16 %v31
    %v79 = vunpack.c.l.b16 %v32
    %v80 = vunpack.c.h.b16 %v32
    %v81 = vunpack.c.l.b16 %v33
    %v82 = vunpack.c.h.b16 %v33
    %v83 = vunpack.c.l.b16 %v34
    %v84 = vunpack.c.h.b16 %v34
    %v85 = vunpack.c.l.b16 %v35
    %v86 = vunpack.c.h.b16 %v35
    %v87 = vunpack.c.l.b16 %v36
    %v88 = vunpack.c.h.b16 %v36
    %v89 = vunpack.c.l.b16 %v37
    %v90 = vunpack.c.h.b16 %v37
    %v91 = vunpack.c.l.b16 %v38
    %v92 = vunpack.c.h.b16 %v38
    %v93 = vunpack.c.l.b16 %v39
    %v94 = vunpack.c.h.b16 %v39
    %v95 = vunpack.c.l.b16 %v40
    %v96 = vunpack.c.h.b16 %v40
    %v97 = vunpack.c.l.b16 %v41
    %v98 = vunpack.c.h.b16 %v41
    %v99 = vunpack.c.l.b16 %v42
    %v100 = vunpack.c.h.b16 %v42
    %v101 = vunpack.c.l.b16 %v43
    %v102 = vunpack.c.h.b16 %v43
    %v103 = vunpack.c.l.b16 %v44
    %v104 = vunpack.c.h.b16 %v44
    %v105 = vpack.c.b16 %v75, %v73
    %v106 = vpack.c.b16 %v76, %v74
    %v107 = vpack.c.b16 %v79, %v77
    %v108 = vpack.c.b16 %v80, %v78
    %v109 = vpack.c.b16 %v83, %v81
    %v110 = vpack.c.b16 %v84, %v82
    %v111 = vpack.c.b16 %v87, %v85
    %v112 = vpack.c.b16 %v88, %v86
    %v113 = vpack.c.b16 %v91, %v89
    %v114 = vpack.c.b16 %v92, %v90
    %v115 = vpack.c.b16 %v95, %v93
    %v116 = vpack.c.b16 %v96, %v94
    %v117 = vpack.c.b16 %v99, %v97
    %v118 = vpack.c.b16 %v100, %v98
    %v119 = vpack.c.b16 %v103, %v101
    %v120 = vpack.c.b16 %v104, %v102
    %137 = vmatprep.subr.bf16.mxu0 %v106
    %138 = vmatpush1.bf16.msra.mxu0 %v105
    %139 = vmatprep.subr.bf16.mxu0 %v108
    %140 = vmatpush1.bf16.msra.mxu0 %v107
    %141 = vmatprep.subr.bf16.mxu0 %v110
    %142 = vmatpush1.bf16.msra.mxu0 %v109
    %143 = vmatprep.subr.bf16.mxu0 %v112
    %144 = vmatpush1.bf16.msra.mxu0 %v111
    %145 = vmatprep.subr.bf16.mxu0 %v114
    %146 = vmatpush1.bf16.msra.mxu0 %v113
    %147 = vmatprep.subr.bf16.mxu0 %v116
    %148 = vmatpush1.bf16.msra.mxu0 %v115
    %149 = vmatprep.subr.bf16.mxu0 %v118
    %150 = vmatpush1.bf16.msra.mxu0 %v117
    %151 = vmatprep.subr.bf16.mxu0 %v120
    %152 = vmatpush1.bf16.msra.mxu0 %v119
    %153 = vmatprep.subr.bf16.mxu0 0
    %154 = vmatpush1.bf16.msra.mxu0 0
    %155 = vmatprep.subr.bf16.mxu0 0
    %156 = vmatpush1.bf16.msra.mxu0 0
    %157 = vmatprep.subr.bf16.mxu0 0
    %158 = vmatpush1.bf16.msra.mxu0 0
    %159 = vmatprep.subr.bf16.mxu0 0
    %160 = vmatpush1.bf16.msra.mxu0 0
    %161 = vmatprep.subr.bf16.mxu0 0
    %162 = vmatpush1.bf16.msra.mxu0 0
    %163 = vmatprep.subr.bf16.mxu0 0
    %164 = vmatpush1.bf16.msra.mxu0 0
    %165 = vmatprep.subr.bf16.mxu0 0
    %166 = vmatpush1.bf16.msra.mxu0 0
    %167 = vmatprep.subr.bf16.mxu0 0
    %168 = vmatpush1.bf16.msra.mxu0 0
    %169 = vmatprep.mubr.bf16.mxu0 0
    %170 = vmatmul.mubr.bf16.gmra.mrb[0].mxu0 %v28
    %v171 = vpop.f32.mrb[0].mxu0
    %v172 = vadd.f32 %v50, %v171
    %v173 = vpop.f32.mrb[0].mxu0
    %v174 = vadd.f32 %v54, %v173
    %v175 = vpop.f32.mrb[0].mxu0
    %v176 = vpop.f32.mrb[0].mxu0
    %177 = vdwg.mxu0
    %v178 = vmax.f32 %v172, 0.0
    %v179 = vmax.f32 %v174, 0.0
    %v180 = vpack.c.bf16 %v178, %v178
    %v181 = vpack.c.bf16 %v179, %v179
    %v182 = vld [vmem:[%s3] sm:$0xff]
    %v183 = vld [vmem:[%s3 + $0x8] sm:$0xff]
    %v184 = vld [vmem:[%s3 + $0x10] sm:$0xff]
    %v185 = vld [vmem:[%s3 + $0x18] sm:$0xff]
    %v186 = vld [vmem:[%s3 + $0x20] sm:$0xff]
    %v187 = vld [vmem:[%s3 + $0x28] sm:$0xff]
    %v188 = vld [vmem:[%s3 + $0x30] sm:$0xff]
    %v189 = vld [vmem:[%s3 + $0x38] sm:$0xff]
    %v190 = vld [vmem:[%s3 + $0x40] sm:$0xff]
    %v191 = vld [vmem:[%s3 + $0x48] sm:$0xff]
    %v192 = vld [vmem:[%s3 + $0x50] sm:$0xff]
    %v193 = vld [vmem:[%s3 + $0x58] sm:$0xff]
    %v194 = vld [vmem:[%s3 + $0x60] sm:$0xff]
    %v195 = vld [vmem:[%s3 + $0x68] sm:$0xff]
    %v196 = vld [vmem:[%s3 + $0x70] sm:$0xff]
    %v197 = vld [vmem:[%s3 + $0x78] sm:$0xff]
    %v198 = vld [vmem:[%s3 + $0x80] sm:$0xff]
    %v199 = vld [vmem:[%s3 + $0x88] sm:$0xff]
    %v200 = vld [vmem:[%s3 + $0x90] sm:$0xff]
    %v201 = vld [vmem:[%s3 + $0x98] sm:$0xff]
    %v202 = vld [vmem:[%s3 + $0xa0] sm:$0xff]
    %v203 = vld [vmem:[%s3 + $0xa8] sm:$0xff]
    %v204 = vld [vmem:[%s3 + $0xb0] sm:$0xff]
    %v205 = vld [vmem:[%s3 + $0xb8] sm:$0xff]
    %v206 = vld [vmem:[%s3 + $0xc0] sm:$0xff]
    %v207 = vld [vmem:[%s3 + $0xc8] sm:$0xff]
    %v208 = vld [vmem:[%s3 + $0xd0] sm:$0xff]
    %v209 = vld [vmem:[%s3 + $0xd8] sm:$0xff]
    %v210 = vld [vmem:[%s3 + $0xe0] sm:$0xff]
    %v211 = vld [vmem:[%s3 + $0xe8] sm:$0xff]
    %v212 = vld [vmem:[%s3 + $0xf0] sm:$0xff]
    %v213 = vld [vmem:[%s3 + $0xf8] sm:$0xff]
    %v214 = vld [vmem:[%s4] sm:$0x3]
    %v216 = vlaneseq
    %v217 = vshrl.u32 %v216, 7
    %v218 = vsub.s32 0, %v217
    %v219 = vrot.slane %v214, %v218
    %v220 = vlaneseq
    %v221 = vshrl.u32 %v220, 7
    %v222 = vsub.s32 1, %v221
    %v223 = vrot.slane %v214, %v222
    %v258 = vunpack.c.l.b16 %v182
    %v259 = vunpack.c.h.b16 %v182
    %v260 = vunpack.c.l.b16 %v183
    %v261 = vunpack.c.h.b16 %v183
    %v262 = vunpack.c.l.b16 %v184
    %v263 = vunpack.c.h.b16 %v184
    %v264 = vunpack.c.l.b16 %v185
    %v265 = vunpack.c.h.b16 %v185
    %v266 = vunpack.c.l.b16 %v186
    %v267 = vunpack.c.h.b16 %v186
    %v268 = vunpack.c.l.b16 %v187
    %v269 = vunpack.c.h.b16 %v187
    %v270 = vunpack.c.l.b16 %v188
    %v271 = vunpack.c.h.b16 %v188
    %v272 = vunpack.c.l.b16 %v189
    %v273 = vunpack.c.h.b16 %v189
    %v274 = vunpack.c.l.b16 %v190
    %v275 = vunpack.c.h.b16 %v190
    %v276 = vunpack.c.l.b16 %v191
    %v277 = vunpack.c.h.b16 %v191
    %v278 = vunpack.c.l.b16 %v192
    %v279 = vunpack.c.h.b16 %v192
    %v280 = vunpack.c.l.b16 %v193
    %v281 = vunpack.c.h.b16 %v193
    %v282 = vunpack.c.l.b16 %v194
    %v283 = vunpack.c.h.b16 %v194
    %v284 = vunpack.c.l.b16 %v195
    %v285 = vunpack.c.h.b16 %v195
    %v286 = vunpack.c.l.b16 %v196
    %v287 = vunpack.c.h.b16 %v196
    %v288 = vunpack.c.l.b16 %v197
    %v289 = vunpack.c.h.b16 %v197
    %v290 = vunpack.c.l.b16 %v198
    %v291 = vunpack.c.h.b16 %v198
    %v292 = vunpack.c.l.b16 %v199
    %v293 = vunpack.c.h.b16 %v199
    %v294 = vunpack.c.l.b16 %v200
    %v295 = vunpack.c.h.b16 %v200
    %v296 = vunpack.c.l.b16 %v201
    %v297 = vunpack.c.h.b16 %v201
    %v298 = vunpack.c.l.b16 %v202
    %v299 = vunpack.c.h.b16 %v202
    %v300 = vunpack.c.l.b16 %v203
    %v301 = vunpack.c.h.b16 %v203
    %v302 = vunpack.c.l.b16 %v204
    %v303 = vunpack.c.h.b16 %v204
    %v304 = vunpack.c.l.b16 %v205
    %v305 = vunpack.c.h.b16 %v205
    %v306 = vunpack.c.l.b16 %v206
    %v307 = vunpack.c.h.b16 %v206
    %v308 = vunpack.c.l.b16 %v207
    %v309 = vunpack.c.h.b16 %v207
    %v310 = vunpack.c.l.b16 %v208
    %v311 = vunpack.c.h.b16 %v208
    %v312 = vunpack.c.l.b16 %v209
    %v313 = vunpack.c.h.b16 %v209
    %v314 = vunpack.c.l.b16 %v210
    %v315 = vunpack.c.h.b16 %v210
    %v316 = vunpack.c.l.b16 %v211
    %v317 = vunpack.c.h.b16 %v211
    %v318 = vunpack.c.l.b16 %v212
    %v319 = vunpack.c.h.b16 %v212
    %v320 = vunpack.c.l.b16 %v213
    %v321 = vunpack.c.h.b16 %v213
    %v322 = vpack.c.b16 %v260, %v258
    %v323 = vpack.c.b16 %v261, %v259
    %v324 = vpack.c.b16 %v264, %v262
    %v325 = vpack.c.b16 %v265, %v263
    %v326 = vpack.c.b16 %v268, %v266
    %v327 = vpack.c.b16 %v269, %v267
    %v328 = vpack.c.b16 %v272, %v270
    %v329 = vpack.c.b16 %v273, %v271
    %v330 = vpack.c.b16 %v276, %v274
    %v331 = vpack.c.b16 %v277, %v275
    %v332 = vpack.c.b16 %v280, %v278
    %v333 = vpack.c.b16 %v281, %v279
    %v334 = vpack.c.b16 %v284, %v282
    %v335 = vpack.c.b16 %v285, %v283
    %v336 = vpack.c.b16 %v288, %v286
    %v337 = vpack.c.b16 %v289, %v287
    %v338 = vpack.c.b16 %v292, %v290
    %v339 = vpack.c.b16 %v293, %v291
    %v340 = vpack.c.b16 %v296, %v294
    %v341 = vpack.c.b16 %v297, %v295
    %v342 = vpack.c.b16 %v300, %v298
    %v343 = vpack.c.b16 %v301, %v299
    %v344 = vpack.c.b16 %v304, %v302
    %v345 = vpack.c.b16 %v305, %v303
    %v346 = vpack.c.b16 %v308, %v306
    %v347 = vpack.c.b16 %v309, %v307
    %v348 = vpack.c.b16 %v312, %v310
    %v349 = vpack.c.b16 %v313, %v311
    %v350 = vpack.c.b16 %v316, %v314
    %v351 = vpack.c.b16 %v317, %v315
    %v352 = vpack.c.b16 %v320, %v318
    %v353 = vpack.c.b16 %v321, %v319
    %386 = vmatprep.subr.bf16.mxu0 %v323
    %387 = vmatpush1.bf16.msra.mxu0 %v322
    %388 = vmatprep.subr.bf16.mxu0 %v325
    %389 = vmatpush1.bf16.msra.mxu0 %v324
    %390 = vmatprep.subr.bf16.mxu0 %v327
    %391 = vmatpush1.bf16.msra.mxu0 %v326
    %392 = vmatprep.subr.bf16.mxu0 %v329
    %393 = vmatpush1.bf16.msra.mxu0 %v328
    %394 = vmatprep.subr.bf16.mxu0 %v331
    %395 = vmatpush1.bf16.msra.mxu0 %v330
    %396 = vmatprep.subr.bf16.mxu0 %v333
    %397 = vmatpush1.bf16.msra.mxu0 %v332
    %398 = vmatprep.subr.bf16.mxu0 %v335
    %399 = vmatpush1.bf16.msra.mxu0 %v334
    %400 = vmatprep.subr.bf16.mxu0 %v337
    %401 = vmatpush1.bf16.msra.mxu0 %v336
    %402 = vmatprep.subr.bf16.mxu0 %v339
    %403 = vmatpush1.bf16.msra.mxu0 %v338
    %404 = vmatprep.subr.bf16.mxu0 %v341
    %405 = vmatpush1.bf16.msra.mxu0 %v340
    %406 = vmatprep.subr.bf16.mxu0 %v343
    %407 = vmatpush1.bf16.msra.mxu0 %v342
    %408 = vmatprep.subr.bf16.mxu0 %v345
    %409 = vmatpush1.bf16.msra.mxu0 %v344
    %410 = vmatprep.subr.bf16.mxu0 %v347
    %411 = vmatpush1.bf16.msra.mxu0 %v346
    %412 = vmatprep.subr.bf16.mxu0 %v349
    %413 = vmatpush1.bf16.msra.mxu0 %v348
    %414 = vmatprep.subr.bf16.mxu0 %v351
    %415 = vmatpush1.bf16.msra.mxu0 %v350
    %416 = vmatprep.subr.bf16.mxu0 %v353
    %417 = vmatpush1.bf16.msra.mxu0 %v352
    %418 = vmatprep.mubr.bf16.mxu0 %v181
    %419 = vmatmul.mubr.bf16.gmra.mrb[0].mxu0 %v180
    %v420 = vpop.f32.mrb[0].mxu0
    %v421 = vadd.f32 %v219, %v420
    %v422 = vpop.f32.mrb[0].mxu0
    %v423 = vadd.f32 %v223, %v422
    %v424 = vpop.f32.mrb[0].mxu0
    %v425 = vpop.f32.mrb[0].mxu0
    %426 = vdwg.mxu0
    %v427 = vmax.f32 %v421, 0.0
    %v428 = vmax.f32 %v423, 0.0
    %v429 = vpack.c.bf16 %v427, %v427
    %v430 = vpack.c.bf16 %v428, %v428
    %v431 = vld [vmem:[%s5] sm:$0xff]
    %v432 = vld [vmem:[%s5 + $0x8] sm:$0xff]
    %v433 = vld [vmem:[%s5 + $0x10] sm:$0xff]
    %v434 = vld [vmem:[%s5 + $0x18] sm:$0xf]
    %v435 = vld [vmem:[%s5 + $0x1c] sm:$0xff]
    %v436 = vld [vmem:[%s5 + $0x24] sm:$0xff]
    %v437 = vld [vmem:[%s5 + $0x2c] sm:$0xff]
    %v438 = vld [vmem:[%s5 + $0x34] sm:$0xf]
    %v439 = vld [vmem:[%s5 + $0x38] sm:$0xff]
    %v440 = vld [vmem:[%s5 + $0x40] sm:$0xff]
    %v441 = vld [vmem:[%s5 + $0x48] sm:$0xff]
    %v442 = vld [vmem:[%s5 + $0x50] sm:$0xf]
    %v443 = vld [vmem:[%s5 + $0x54] sm:$0xff]
    %v444 = vld [vmem:[%s5 + $0x5c] sm:$0xff]
    %v445 = vld [vmem:[%s5 + $0x64] sm:$0xff]
    %v446 = vld [vmem:[%s5 + $0x6c] sm:$0xf]
    %v447 = vld [vmem:[%s5 + $0x70] sm:$0xff]
    %v448 = vld [vmem:[%s5 + $0x78] sm:$0xff]
    %v449 = vld [vmem:[%s5 + $0x80] sm:$0xff]
    %v450 = vld [vmem:[%s5 + $0x88] sm:$0xf]
    %v451 = vld [vmem:[%s5 + $0x8c] sm:$0xff]
    %v452 = vld [vmem:[%s5 + $0x94] sm:$0xff]
    %v453 = vld [vmem:[%s5 + $0x9c] sm:$0xff]
    %v454 = vld [vmem:[%s5 + $0xa4] sm:$0xf]
    %v455 = vld [vmem:[%s5 + $0xa8] sm:$0xff]
    %v456 = vld [vmem:[%s5 + $0xb0] sm:$0xff]
    %v457 = vld [vmem:[%s5 + $0xb8] sm:$0xff]
    %v458 = vld [vmem:[%s5 + $0xc0] sm:$0xf]
    %v459 = vld [vmem:[%s5 + $0xc4] sm:$0xff]
    %v460 = vld [vmem:[%s5 + $0xcc] sm:$0xff]
    %v461 = vld [vmem:[%s5 + $0xd4] sm:$0xff]
    %v462 = vld [vmem:[%s5 + $0xdc] sm:$0xf]
    %v463 = vld [vmem:[%s5 + $0xe0] sm:$0xff]
    %v464 = vld [vmem:[%s5 + $0xe8] sm:$0xff]
    %v465 = vld [vmem:[%s5 + $0xf0] sm:$0xff]
    %v466 = vld [vmem:[%s5 + $0xf8] sm:$0xf]
    %v467 = vld [vmem:[%s5 + $0xfc] sm:$0xff]
    %v468 = vld [vmem:[%s5 + $0x104] sm:$0xff]
    %v469 = vld [vmem:[%s5 + $0x10c] sm:$0xff]
    %v470 = vld [vmem:[%s5 + $0x114] sm:$0xf]
    %v471 = vld [vmem:[%s5 + $0x118] sm:$0xff]
    %v472 = vld [vmem:[%s5 + $0x120] sm:$0xff]
    %v473 = vld [vmem:[%s5 + $0x128] sm:$0xff]
    %v474 = vld [vmem:[%s5 + $0x130] sm:$0xf]
    %v475 = vld [vmem:[%s5 + $0x134] sm:$0xff]
    %v476 = vld [vmem:[%s5 + $0x13c] sm:$0xff]
    %v477 = vld [vmem:[%s5 + $0x144] sm:$0xff]
    %v478 = vld [vmem:[%s5 + $0x14c] sm:$0xf]
    %v479 = vld [vmem:[%s5 + $0x150] sm:$0xff]
    %v480 = vld [vmem:[%s5 + $0x158] sm:$0xff]
    %v481 = vld [vmem:[%s5 + $0x160] sm:$0xff]
    %v482 = vld [vmem:[%s5 + $0x168] sm:$0xf]
    %v483 = vld [vmem:[%s5 + $0x16c] sm:$0xff]
    %v484 = vld [vmem:[%s5 + $0x174] sm:$0xff]
    %v485 = vld [vmem:[%s5 + $0x17c] sm:$0xff]
    %v486 = vld [vmem:[%s5 + $0x184] sm:$0xf]
    %v487 = vld [vmem:[%s5 + $0x188] sm:$0xff]
    %v488 = vld [vmem:[%s5 + $0x190] sm:$0xff]
    %v489 = vld [vmem:[%s5 + $0x198] sm:$0xff]
    %v490 = vld [vmem:[%s5 + $0x1a0] sm:$0xf]
    %v491 = vld [vmem:[%s5 + $0x1a4] sm:$0xff]
    %v492 = vld [vmem:[%s5 + $0x1ac] sm:$0xff]
    %v493 = vld [vmem:[%s5 + $0x1b4] sm:$0xff]
    %v494 = vld [vmem:[%s5 + $0x1bc] sm:$0xf]
    %v495 = vld [vmem:[%s5 + $0x1c0] sm:$0xff]
    %v496 = vld [vmem:[%s5 + $0x1c8] sm:$0xff]
    %v497 = vld [vmem:[%s5 + $0x1d0] sm:$0xff]
    %v498 = vld [vmem:[%s5 + $0x1d8] sm:$0xf]
    %v499 = vld [vmem:[%s5 + $0x1dc] sm:$0xff]
    %v500 = vld [vmem:[%s5 + $0x1e4] sm:$0xff]
    %v501 = vld [vmem:[%s5 + $0x1ec] sm:$0xff]
    %v502 = vld [vmem:[%s5 + $0x1f4] sm:$0xf]
    %v503 = vld [vmem:[%s5 + $0x1f8] sm:$0xff]
    %v504 = vld [vmem:[%s5 + $0x200] sm:$0xff]
    %v505 = vld [vmem:[%s5 + $0x208] sm:$0xff]
    %v506 = vld [vmem:[%s5 + $0x210] sm:$0xf]
    %v507 = vld [vmem:[%s5 + $0x214] sm:$0xff]
    %v508 = vld [vmem:[%s5 + $0x21c] sm:$0xff]
    %v509 = vld [vmem:[%s5 + $0x224] sm:$0xff]
    %v510 = vld [vmem:[%s5 + $0x22c] sm:$0xf]
    %v511 = vld [vmem:[%s5 + $0x230] sm:$0xff]
    %v512 = vld [vmem:[%s5 + $0x238] sm:$0xff]
    %v513 = vld [vmem:[%s5 + $0x240] sm:$0xff]
    %v514 = vld [vmem:[%s5 + $0x248] sm:$0xf]
    %v515 = vld [vmem:[%s5 + $0x24c] sm:$0xff]
    %v516 = vld [vmem:[%s5 + $0x254] sm:$0xff]
    %v517 = vld [vmem:[%s5 + $0x25c] sm:$0xff]
    %v518 = vld [vmem:[%s5 + $0x264] sm:$0xf]
    %v519 = vld [vmem:[%s5 + $0x268] sm:$0xff]
    %v520 = vld [vmem:[%s5 + $0x270] sm:$0xff]
    %v521 = vld [vmem:[%s5 + $0x278] sm:$0xff]
    %v522 = vld [vmem:[%s5 + $0x280] sm:$0xf]
    %v523 = vld [vmem:[%s5 + $0x284] sm:$0xff]
    %v524 = vld [vmem:[%s5 + $0x28c] sm:$0xff]
    %v525 = vld [vmem:[%s5 + $0x294] sm:$0xff]
    %v526 = vld [vmem:[%s5 + $0x29c] sm:$0xf]
    %v527 = vld [vmem:[%s5 + $0x2a0] sm:$0xff]
    %v528 = vld [vmem:[%s5 + $0x2a8] sm:$0xff]
    %v529 = vld [vmem:[%s5 + $0x2b0] sm:$0xff]
    %v530 = vld [vmem:[%s5 + $0x2b8] sm:$0xf]
    %v531 = vld [vmem:[%s5 + $0x2bc] sm:$0xff]
    %v532 = vld [vmem:[%s5 + $0x2c4] sm:$0xff]
    %v533 = vld [vmem:[%s5 + $0x2cc] sm:$0xff]
    %v534 = vld [vmem:[%s5 + $0x2d4] sm:$0xf]
    %v535 = vld [vmem:[%s5 + $0x2d8] sm:$0xff]
    %v536 = vld [vmem:[%s5 + $0x2e0] sm:$0xff]
    %v537 = vld [vmem:[%s5 + $0x2e8] sm:$0xff]
    %v538 = vld [vmem:[%s5 + $0x2f0] sm:$0xf]
    %v539 = vld [vmem:[%s5 + $0x2f4] sm:$0xff]
    %v540 = vld [vmem:[%s5 + $0x2fc] sm:$0xff]
    %v541 = vld [vmem:[%s5 + $0x304] sm:$0xff]
    %v542 = vld [vmem:[%s5 + $0x30c] sm:$0xf]
    %v543 = vld [vmem:[%s5 + $0x310] sm:$0xff]
    %v544 = vld [vmem:[%s5 + $0x318] sm:$0xff]
    %v545 = vld [vmem:[%s5 + $0x320] sm:$0xff]
    %v546 = vld [vmem:[%s5 + $0x328] sm:$0xf]
    %v547 = vld [vmem:[%s5 + $0x32c] sm:$0xff]
    %v548 = vld [vmem:[%s5 + $0x334] sm:$0xff]
    %v549 = vld [vmem:[%s5 + $0x33c] sm:$0xff]
    %v550 = vld [vmem:[%s5 + $0x344] sm:$0xf]
    %v551 = vld [vmem:[%s5 + $0x348] sm:$0xff]
    %v552 = vld [vmem:[%s5 + $0x350] sm:$0xff]
    %v553 = vld [vmem:[%s5 + $0x358] sm:$0xff]
    %v554 = vld [vmem:[%s5 + $0x360] sm:$0xf]
    %v555 = vld [vmem:[%s5 + $0x364] sm:$0xff]
    %v556 = vld [vmem:[%s5 + $0x36c] sm:$0xff]
    %v557 = vld [vmem:[%s5 + $0x374] sm:$0xff]
    %v558 = vld [vmem:[%s5 + $0x37c] sm:$0xf]
    %v559 = vld [vmem:[%s6] sm:$0x7f]
    %v561 = vlaneseq
    %v562 = vshrl.u32 %v561, 7
    %v563 = vsub.s32 0, %v562
    %v564 = vrot.slane %v559, %v563
    %v565 = vlaneseq
    %v566 = vshrl.u32 %v565, 7
    %v567 = vsub.s32 1, %v566
    %v568 = vrot.slane %v559, %v567
    %v569 = vlaneseq
    %v570 = vshrl.u32 %v569, 7
    %v571 = vsub.s32 2, %v570
    %v572 = vrot.slane %v559, %v571
    %v573 = vlaneseq
    %v574 = vshrl.u32 %v573, 7
    %v575 = vsub.s32 3, %v574
    %v576 = vrot.slane %v559, %v575
    %v577 = vlaneseq
    %v578 = vshrl.u32 %v577, 7
    %v579 = vsub.s32 4, %v578
    %v580 = vrot.slane %v559, %v579
    %v581 = vlaneseq
    %v582 = vshrl.u32 %v581, 7
    %v583 = vsub.s32 5, %v582
    %v584 = vrot.slane %v559, %v583
    %v585 = vlaneseq
    %v586 = vshrl.u32 %v585, 7
    %v587 = vsub.s32 6, %v586
    %v588 = vrot.slane %v559, %v587
    %v724 = vunpack.c.l.b16 %v431
    %v725 = vunpack.c.h.b16 %v431
    %v726 = vunpack.c.l.b16 %v432
    %v727 = vunpack.c.h.b16 %v432
    %v728 = vunpack.c.l.b16 %v433
    %v729 = vunpack.c.h.b16 %v433
    %v730 = vunpack.c.l.b16 %v434
    %v731 = vunpack.c.l.b16 %v435
    %v732 = vunpack.c.h.b16 %v435
    %v733 = vunpack.c.l.b16 %v436
    %v734 = vunpack.c.h.b16 %v436
    %v735 = vunpack.c.l.b16 %v437
    %v736 = vunpack.c.h.b16 %v437
    %v737 = vunpack.c.l.b16 %v438
    %v738 = vunpack.c.l.b16 %v439
    %v739 = vunpack.c.h.b16 %v439
    %v740 = vunpack.c.l.b16 %v440
    %v741 = vunpack.c.h.b16 %v440
    %v742 = vunpack.c.l.b16 %v441
    %v743 = vunpack.c.h.b16 %v441
    %v744 = vunpack.c.l.b16 %v442
    %v745 = vunpack.c.l.b16 %v443
    %v746 = vunpack.c.h.b16 %v443
    %v747 = vunpack.c.l.b16 %v444
    %v748 = vunpack.c.h.b16 %v444
    %v749 = vunpack.c.l.b16 %v445
    %v750 = vunpack.c.h.b16 %v445
    %v751 = vunpack.c.l.b16 %v446
    %v752 = vunpack.c.l.b16 %v447
    %v753 = vunpack.c.h.b16 %v447
    %v754 = vunpack.c.l.b16 %v448
    %v755 = vunpack.c.h.b16 %v448
    %v756 = vunpack.c.l.b16 %v449
    %v757 = vunpack.c.h.b16 %v449
    %v758 = vunpack.c.l.b16 %v450
    %v759 = vunpack.c.l.b16 %v451
    %v760 = vunpack.c.h.b16 %v451
    %v761 = vunpack.c.l.b16 %v452
    %v762 = vunpack.c.h.b16 %v452
    %v763 = vunpack.c.l.b16 %v453
    %v764 = vunpack.c.h.b16 %v453
    %v765 = vunpack.c.l.b16 %v454
    %v766 = vunpack.c.l.b16 %v455
    %v767 = vunpack.c.h.b16 %v455
    %v768 = vunpack.c.l.b16 %v456
    %v769 = vunpack.c.h.b16 %v456
    %v770 = vunpack.c.l.b16 %v457
    %v771 = vunpack.c.h.b16 %v457
    %v772 = vunpack.c.l.b16 %v458
    %v773 = vunpack.c.l.b16 %v459
    %v774 = vunpack.c.h.b16 %v459
    %v775 = vunpack.c.l.b16 %v460
    %v776 = vunpack.c.h.b16 %v460
    %v777 = vunpack.c.l.b16 %v461
    %v778 = vunpack.c.h.b16 %v461
    %v779 = vunpack.c.l.b16 %v462
    %v780 = vunpack.c.l.b16 %v463
    %v781 = vunpack.c.h.b16 %v463
    %v782 = vunpack.c.l.b16 %v464
    %v783 = vunpack.c.h.b16 %v464
    %v784 = vunpack.c.l.b16 %v465
    %v785 = vunpack.c.h.b16 %v465
    %v786 = vunpack.c.l.b16 %v466
    %v787 = vunpack.c.l.b16 %v467
    %v788 = vunpack.c.h.b16 %v467
    %v789 = vunpack.c.l.b16 %v468
    %v790 = vunpack.c.h.b16 %v468
    %v791 = vunpack.c.l.b16 %v469
    %v792 = vunpack.c.h.b16 %v469
    %v793 = vunpack.c.l.b16 %v470
    %v794 = vunpack.c.l.b16 %v471
    %v795 = vunpack.c.h.b16 %v471
    %v796 = vunpack.c.l.b16 %v472
    %v797 = vunpack.c.h.b16 %v472
    %v798 = vunpack.c.l.b16 %v473
    %v799 = vunpack.c.h.b16 %v473
    %v800 = vunpack.c.l.b16 %v474
    %v801 = vunpack.c.l.b16 %v475
    %v802 = vunpack.c.h.b16 %v475
    %v803 = vunpack.c.l.b16 %v476
    %v804 = vunpack.c.h.b16 %v476
    %v805 = vunpack.c.l.b16 %v477
    %v806 = vunpack.c.h.b16 %v477
    %v807 = vunpack.c.l.b16 %v478
    %v808 = vunpack.c.l.b16 %v479
    %v809 = vunpack.c.h.b16 %v479
    %v810 = vunpack.c.l.b16 %v480
    %v811 = vunpack.c.h.b16 %v480
    %v812 = vunpack.c.l.b16 %v481
    %v813 = vunpack.c.h.b16 %v481
    %v814 = vunpack.c.l.b16 %v482
    %v815 = vunpack.c.l.b16 %v483
    %v816 = vunpack.c.h.b16 %v483
    %v817 = vunpack.c.l.b16 %v484
    %v818 = vunpack.c.h.b16 %v484
    %v819 = vunpack.c.l.b16 %v485
    %v820 = vunpack.c.h.b16 %v485
    %v821 = vunpack.c.l.b16 %v486
    %v822 = vunpack.c.l.b16 %v487
    %v823 = vunpack.c.h.b16 %v487
    %v824 = vunpack.c.l.b16 %v488
    %v825 = vunpack.c.h.b16 %v488
    %v826 = vunpack.c.l.b16 %v489
    %v827 = vunpack.c.h.b16 %v489
    %v828 = vunpack.c.l.b16 %v490
    %v829 = vunpack.c.l.b16 %v491
    %v830 = vunpack.c.h.b16 %v491
    %v831 = vunpack.c.l.b16 %v492
    %v832 = vunpack.c.h.b16 %v492
    %v833 = vunpack.c.l.b16 %v493
    %v834 = vunpack.c.h.b16 %v493
    %v835 = vunpack.c.l.b16 %v494
    %v836 = vunpack.c.l.b16 %v495
    %v837 = vunpack.c.h.b16 %v495
    %v838 = vunpack.c.l.b16 %v496
    %v839 = vunpack.c.h.b16 %v496
    %v840 = vunpack.c.l.b16 %v497
    %v841 = vunpack.c.h.b16 %v497
    %v842 = vunpack.c.l.b16 %v498
    %v843 = vunpack.c.l.b16 %v499
    %v844 = vunpack.c.h.b16 %v499
    %v845 = vunpack.c.l.b16 %v500
    %v846 = vunpack.c.h.b16 %v500
    %v847 = vunpack.c.l.b16 %v501
    %v848 = vunpack.c.h.b16 %v501
    %v849 = vunpack.c.l.b16 %v502
    %v850 = vunpack.c.l.b16 %v503
    %v851 = vunpack.c.h.b16 %v503
    %v852 = vunpack.c.l.b16 %v504
    %v853 = vunpack.c.h.b16 %v504
    %v854 = vunpack.c.l.b16 %v505
    %v855 = vunpack.c.h.b16 %v505
    %v856 = vunpack.c.l.b16 %v506
    %v857 = vunpack.c.l.b16 %v507
    %v858 = vunpack.c.h.b16 %v507
    %v859 = vunpack.c.l.b16 %v508
    %v860 = vunpack.c.h.b16 %v508
    %v861 = vunpack.c.l.b16 %v509
    %v862 = vunpack.c.h.b16 %v509
    %v863 = vunpack.c.l.b16 %v510
    %v864 = vunpack.c.l.b16 %v511
    %v865 = vunpack.c.h.b16 %v511
    %v866 = vunpack.c.l.b16 %v512
    %v867 = vunpack.c.h.b16 %v512
    %v868 = vunpack.c.l.b16 %v513
    %v869 = vunpack.c.h.b16 %v513
    %v870 = vunpack.c.l.b16 %v514
    %v871 = vunpack.c.l.b16 %v515
    %v872 = vunpack.c.h.b16 %v515
    %v873 = vunpack.c.l.b16 %v516
    %v874 = vunpack.c.h.b16 %v516
    %v875 = vunpack.c.l.b16 %v517
    %v876 = vunpack.c.h.b16 %v517
    %v877 = vunpack.c.l.b16 %v518
    %v878 = vunpack.c.l.b16 %v519
    %v879 = vunpack.c.h.b16 %v519
    %v880 = vunpack.c.l.b16 %v520
    %v881 = vunpack.c.h.b16 %v520
    %v882 = vunpack.c.l.b16 %v521
    %v883 = vunpack.c.h.b16 %v521
    %v884 = vunpack.c.l.b16 %v522
    %v885 = vunpack.c.l.b16 %v523
    %v886 = vunpack.c.h.b16 %v523
    %v887 = vunpack.c.l.b16 %v524
    %v888 = vunpack.c.h.b16 %v524
    %v889 = vunpack.c.l.b16 %v525
    %v890 = vunpack.c.h.b16 %v525
    %v891 = vunpack.c.l.b16 %v526
    %v892 = vunpack.c.l.b16 %v527
    %v893 = vunpack.c.h.b16 %v527
    %v894 = vunpack.c.l.b16 %v528
    %v895 = vunpack.c.h.b16 %v528
    %v896 = vunpack.c.l.b16 %v529
    %v897 = vunpack.c.h.b16 %v529
    %v898 = vunpack.c.l.b16 %v530
    %v899 = vunpack.c.l.b16 %v531
    %v900 = vunpack.c.h.b16 %v531
    %v901 = vunpack.c.l.b16 %v532
    %v902 = vunpack.c.h.b16 %v532
    %v903 = vunpack.c.l.b16 %v533
    %v904 = vunpack.c.h.b16 %v533
    %v905 = vunpack.c.l.b16 %v534
    %v906 = vunpack.c.l.b16 %v535
    %v907 = vunpack.c.h.b16 %v535
    %v908 = vunpack.c.l.b16 %v536
    %v909 = vunpack.c.h.b16 %v536
    %v910 = vunpack.c.l.b16 %v537
    %v911 = vunpack.c.h.b16 %v537
    %v912 = vunpack.c.l.b16 %v538
    %v913 = vunpack.c.l.b16 %v539
    %v914 = vunpack.c.h.b16 %v539
    %v915 = vunpack.c.l.b16 %v540
    %v916 = vunpack.c.h.b16 %v540
    %v917 = vunpack.c.l.b16 %v541
    %v918 = vunpack.c.h.b16 %v541
    %v919 = vunpack.c.l.b16 %v542
    %v920 = vunpack.c.l.b16 %v543
    %v921 = vunpack.c.h.b16 %v543
    %v922 = vunpack.c.l.b16 %v544
    %v923 = vunpack.c.h.b16 %v544
    %v924 = vunpack.c.l.b16 %v545
    %v925 = vunpack.c.h.b16 %v545
    %v926 = vunpack.c.l.b16 %v546
    %v927 = vunpack.c.l.b16 %v547
    %v928 = vunpack.c.h.b16 %v547
    %v929 = vunpack.c.l.b16 %v548
    %v930 = vunpack.c.h.b16 %v548
    %v931 = vunpack.c.l.b16 %v549
    %v932 = vunpack.c.h.b16 %v549
    %v933 = vunpack.c.l.b16 %v550
    %v934 = vunpack.c.l.b16 %v551
    %v935 = vunpack.c.h.b16 %v551
    %v936 = vunpack.c.l.b16 %v552
    %v937 = vunpack.c.h.b16 %v552
    %v938 = vunpack.c.l.b16 %v553
    %v939 = vunpack.c.h.b16 %v553
    %v940 = vunpack.c.l.b16 %v554
    %v941 = vunpack.c.l.b16 %v555
    %v942 = vunpack.c.h.b16 %v555
    %v943 = vunpack.c.l.b16 %v556
    %v944 = vunpack.c.h.b16 %v556
    %v945 = vunpack.c.l.b16 %v557
    %v946 = vunpack.c.h.b16 %v557
    %v947 = vunpack.c.l.b16 %v558
    %v948 = vpack.c.b16 %v731, %v724
    %v949 = vpack.c.b16 %v732, %v725
    %v950 = vpack.c.b16 %v733, %v726
    %v951 = vpack.c.b16 %v734, %v727
    %v952 = vpack.c.b16 %v735, %v728
    %v953 = vpack.c.b16 %v736, %v729
    %v954 = vpack.c.b16 %v737, %v730
    %v955 = vpack.c.b16 %v745, %v738
    %v956 = vpack.c.b16 %v746, %v739
    %v957 = vpack.c.b16 %v747, %v740
    %v958 = vpack.c.b16 %v748, %v741
    %v959 = vpack.c.b16 %v749, %v742
    %v960 = vpack.c.b16 %v750, %v743
    %v961 = vpack.c.b16 %v751, %v744
    %v962 = vpack.c.b16 %v759, %v752
    %v963 = vpack.c.b16 %v760, %v753
    %v964 = vpack.c.b16 %v761, %v754
    %v965 = vpack.c.b16 %v762, %v755
    %v966 = vpack.c.b16 %v763, %v756
    %v967 = vpack.c.b16 %v764, %v757
    %v968 = vpack.c.b16 %v765, %v758
    %v969 = vpack.c.b16 %v773, %v766
    %v970 = vpack.c.b16 %v774, %v767
    %v971 = vpack.c.b16 %v775, %v768
    %v972 = vpack.c.b16 %v776, %v769
    %v973 = vpack.c.b16 %v777, %v770
    %v974 = vpack.c.b16 %v778, %v771
    %v975 = vpack.c.b16 %v779, %v772
    %v976 = vpack.c.b16 %v787, %v780
    %v977 = vpack.c.b16 %v788, %v781
    %v978 = vpack.c.b16 %v789, %v782
    %v979 = vpack.c.b16 %v790, %v783
    %v980 = vpack.c.b16 %v791, %v784
    %v981 = vpack.c.b16 %v792, %v785
    %v982 = vpack.c.b16 %v793, %v786
    %v983 = vpack.c.b16 %v801, %v794
    %v984 = vpack.c.b16 %v802, %v795
    %v985 = vpack.c.b16 %v803, %v796
    %v986 = vpack.c.b16 %v804, %v797
    %v987 = vpack.c.b16 %v805, %v798
    %v988 = vpack.c.b16 %v806, %v799
    %v989 = vpack.c.b16 %v807, %v800
    %v990 = vpack.c.b16 %v815, %v808
    %v991 = vpack.c.b16 %v816, %v809
    %v992 = vpack.c.b16 %v817, %v810
    %v993 = vpack.c.b16 %v818, %v811
    %v994 = vpack.c.b16 %v819, %v812
    %v995 = vpack.c.b16 %v820, %v813
    %v996 = vpack.c.b16 %v821, %v814
    %v997 = vpack.c.b16 %v829, %v822
    %v998 = vpack.c.b16 %v830, %v823
    %v999 = vpack.c.b16 %v831, %v824
    %v1000 = vpack.c.b16 %v832, %v825
    %v1001 = vpack.c.b16 %v833, %v826
    %v1002 = vpack.c.b16 %v834, %v827
    %v1003 = vpack.c.b16 %v835, %v828
    %v1004 = vpack.c.b16 %v843, %v836
    %v1005 = vpack.c.b16 %v844, %v837
    %v1006 = vpack.c.b16 %v845, %v838
    %v1007 = vpack.c.b16 %v846, %v839
    %v1008 = vpack.c.b16 %v847, %v840
    %v1009 = vpack.c.b16 %v848, %v841
    %v1010 = vpack.c.b16 %v849, %v842
    %v1011 = vpack.c.b16 %v857, %v850
    %v1012 = vpack.c.b16 %v858, %v851
    %v1013 = vpack.c.b16 %v859, %v852
    %v1014 = vpack.c.b16 %v860, %v853
    %v1015 = vpack.c.b16 %v861, %v854
    %v1016 = vpack.c.b16 %v862, %v855
    %v1017 = vpack.c.b16 %v863, %v856
    %v1018 = vpack.c.b16 %v871, %v864
    %v1019 = vpack.c.b16 %v872, %v865
    %v1020 = vpack.c.b16 %v873, %v866
    %v1021 = vpack.c.b16 %v874, %v867
    %v1022 = vpack.c.b16 %v875, %v868
    %v1023 = vpack.c.b16 %v876, %v869
    %v1024 = vpack.c.b16 %v877, %v870
    %v1025 = vpack.c.b16 %v885, %v878
    %v1026 = vpack.c.b16 %v886, %v879
    %v1027 = vpack.c.b16 %v887, %v880
    %v1028 = vpack.c.b16 %v888, %v881
    %v1029 = vpack.c.b16 %v889, %v882
    %v1030 = vpack.c.b16 %v890, %v883
    %v1031 = vpack.c.b16 %v891, %v884
    %v1032 = vpack.c.b16 %v899, %v892
    %v1033 = vpack.c.b16 %v900, %v893
    %v1034 = vpack.c.b16 %v901, %v894
    %v1035 = vpack.c.b16 %v902, %v895
    %v1036 = vpack.c.b16 %v903, %v896
    %v1037 = vpack.c.b16 %v904, %v897
    %v1038 = vpack.c.b16 %v905, %v898
    %v1039 = vpack.c.b16 %v913, %v906
    %v1040 = vpack.c.b16 %v914, %v907
    %v1041 = vpack.c.b16 %v915, %v908
    %v1042 = vpack.c.b16 %v916, %v909
    %v1043 = vpack.c.b16 %v917, %v910
    %v1044 = vpack.c.b16 %v918, %v911
    %v1045 = vpack.c.b16 %v919, %v912
    %v1046 = vpack.c.b16 %v927, %v920
    %v1047 = vpack.c.b16 %v928, %v921
    %v1048 = vpack.c.b16 %v929, %v922
    %v1049 = vpack.c.b16 %v930, %v923
    %v1050 = vpack.c.b16 %v931, %v924
    %v1051 = vpack.c.b16 %v932, %v925
    %v1052 = vpack.c.b16 %v933, %v926
    %v1053 = vpack.c.b16 %v941, %v934
    %v1054 = vpack.c.b16 %v942, %v935
    %v1055 = vpack.c.b16 %v943, %v936
    %v1056 = vpack.c.b16 %v944, %v937
    %v1057 = vpack.c.b16 %v945, %v938
    %v1058 = vpack.c.b16 %v946, %v939
    %v1059 = vpack.c.b16 %v947, %v940
    %1172 = vmatprep.subr.bf16.mxu0 %v949
    %1173 = vmatpush1.bf16.msra.mxu0 %v948
    %1174 = vmatprep.subr.bf16.mxu0 %v956
    %1175 = vmatpush1.bf16.msra.mxu0 %v955
    %1176 = vmatprep.subr.bf16.mxu0 %v963
    %1177 = vmatpush1.bf16.msra.mxu0 %v962
    %1178 = vmatprep.subr.bf16.mxu0 %v970
    %1179 = vmatpush1.bf16.msra.mxu0 %v969
    %1180 = vmatprep.subr.bf16.mxu0 %v977
    %1181 = vmatpush1.bf16.msra.mxu0 %v976
    %1182 = vmatprep.subr.bf16.mxu0 %v984
    %1183 = vmatpush1.bf16.msra.mxu0 %v983
    %1184 = vmatprep.subr.bf16.mxu0 %v991
    %1185 = vmatpush1.bf16.msra.mxu0 %v990
    %1186 = vmatprep.subr.bf16.mxu0 %v998
    %1187 = vmatpush1.bf16.msra.mxu0 %v997
    %1188 = vmatprep.subr.bf16.mxu0 %v1005
    %1189 = vmatpush1.bf16.msra.mxu0 %v1004
    %1190 = vmatprep.subr.bf16.mxu0 %v1012
    %1191 = vmatpush1.bf16.msra.mxu0 %v1011
    %1192 = vmatprep.subr.bf16.mxu0 %v1019
    %1193 = vmatpush1.bf16.msra.mxu0 %v1018
    %1194 = vmatprep.subr.bf16.mxu0 %v1026
    %1195 = vmatpush1.bf16.msra.mxu0 %v1025
    %1196 = vmatprep.subr.bf16.mxu0 %v1033
    %1197 = vmatpush1.bf16.msra.mxu0 %v1032
    %1198 = vmatprep.subr.bf16.mxu0 %v1040
    %1199 = vmatpush1.bf16.msra.mxu0 %v1039
    %1200 = vmatprep.subr.bf16.mxu0 %v1047
    %1201 = vmatpush1.bf16.msra.mxu0 %v1046
    %1202 = vmatprep.subr.bf16.mxu0 %v1054
    %1203 = vmatpush1.bf16.msra.mxu0 %v1053
    %1204 = vmatprep.mubr.bf16.mxu0 %v430
    %1205 = vmatmul.mubr.bf16.gmra.mrb[0].mxu0 %v429
    %v1206 = vpop.f32.mrb[0].mxu0
    %v1207 = vadd.f32 %v564, %v1206
    %v1208 = vpop.f32.mrb[0].mxu0
    %v1209 = vadd.f32 %v568, %v1208
    %v1210 = vpop.f32.mrb[0].mxu0
    %v1211 = vpop.f32.mrb[0].mxu0
    %1212 = vdwg.mxu0
    %1213 = vmatprep.subr.bf16.mxu0 %v951
    %1214 = vmatpush1.bf16.msra.mxu0 %v950
    %1215 = vmatprep.subr.bf16.mxu0 %v958
    %1216 = vmatpush1.bf16.msra.mxu0 %v957
    %1217 = vmatprep.subr.bf16.mxu0 %v965
    %1218 = vmatpush1.bf16.msra.mxu0 %v964
    %1219 = vmatprep.subr.bf16.mxu0 %v972
    %1220 = vmatpush1.bf16.msra.mxu0 %v971
    %1221 = vmatprep.subr.bf16.mxu0 %v979
    %1222 = vmatpush1.bf16.msra.mxu0 %v978
    %1223 = vmatprep.subr.bf16.mxu0 %v986
    %1224 = vmatpush1.bf16.msra.mxu0 %v985
    %1225 = vmatprep.subr.bf16.mxu0 %v993
    %1226 = vmatpush1.bf16.msra.mxu0 %v992
    %1227 = vmatprep.subr.bf16.mxu0 %v1000
    %1228 = vmatpush1.bf16.msra.mxu0 %v999
    %1229 = vmatprep.subr.bf16.mxu0 %v1007
    %1230 = vmatpush1.bf16.msra.mxu0 %v1006
    %1231 = vmatprep.subr.bf16.mxu0 %v1014
    %1232 = vmatpush1.bf16.msra.mxu0 %v1013
    %1233 = vmatprep.subr.bf16.mxu0 %v1021
    %1234 = vmatpush1.bf16.msra.mxu0 %v1020
    %1235 = vmatprep.subr.bf16.mxu0 %v1028
    %1236 = vmatpush1.bf16.msra.mxu0 %v1027
    %1237 = vmatprep.subr.bf16.mxu0 %v1035
    %1238 = vmatpush1.bf16.msra.mxu0 %v1034
    %1239 = vmatprep.subr.bf16.mxu0 %v1042
    %1240 = vmatpush1.bf16.msra.mxu0 %v1041
    %1241 = vmatprep.subr.bf16.mxu0 %v1049
    %1242 = vmatpush1.bf16.msra.mxu0 %v1048
    %1243 = vmatprep.subr.bf16.mxu0 %v1056
    %1244 = vmatpush1.bf16.msra.mxu0 %v1055
    %1245 = vmatprep.mubr.bf16.mxu0 %v430
    %1246 = vmatmul.mubr.bf16.gmra.mrb[0].mxu0 %v429
    %v1247 = vpop.f32.mrb[0].mxu0
    %v1248 = vadd.f32 %v572, %v1247
    %v1249 = vpop.f32.mrb[0].mxu0
    %v1250 = vadd.f32 %v576, %v1249
    %v1251 = vpop.f32.mrb[0].mxu0
    %v1252 = vpop.f32.mrb[0].mxu0
    %1253 = vdwg.mxu0
    %1254 = vmatprep.subr.bf16.mxu0 %v953
    %1255 = vmatpush1.bf16.msra.mxu0 %v952
    %1256 = vmatprep.subr.bf16.mxu0 %v960
    %1257 = vmatpush1.bf16.msra.mxu0 %v959
    %1258 = vmatprep.subr.bf16.mxu0 %v967
    %1259 = vmatpush1.bf16.msra.mxu0 %v966
    %1260 = vmatprep.subr.bf16.mxu0 %v974
    %1261 = vmatpush1.bf16.msra.mxu0 %v973
    %1262 = vmatprep.subr.bf16.mxu0 %v981
    %1263 = vmatpush1.bf16.msra.mxu0 %v980
    %1264 = vmatprep.subr.bf16.mxu0 %v988
    %1265 = vmatpush1.bf16.msra.mxu0 %v987
    %1266 = vmatprep.subr.bf16.mxu0 %v995
    %1267 = vmatpush1.bf16.msra.mxu0 %v994
    %1268 = vmatprep.subr.bf16.mxu0 %v1002
    %1269 = vmatpush1.bf16.msra.mxu0 %v1001
    %1270 = vmatprep.subr.bf16.mxu0 %v1009
    %1271 = vmatpush1.bf16.msra.mxu0 %v1008
    %1272 = vmatprep.subr.bf16.mxu0 %v1016
    %1273 = vmatpush1.bf16.msra.mxu0 %v1015
    %1274 = vmatprep.subr.bf16.mxu0 %v1023
    %1275 = vmatpush1.bf16.msra.mxu0 %v1022
    %1276 = vmatprep.subr.bf16.mxu0 %v1030
    %1277 = vmatpush1.bf16.msra.mxu0 %v1029
    %1278 = vmatprep.subr.bf16.mxu0 %v1037
    %1279 = vmatpush1.bf16.msra.mxu0 %v1036
    %1280 = vmatprep.subr.bf16.mxu0 %v1044
    %1281 = vmatpush1.bf16.msra.mxu0 %v1043
    %1282 = vmatprep.subr.bf16.mxu0 %v1051
    %1283 = vmatpush1.bf16.msra.mxu0 %v1050
    %1284 = vmatprep.subr.bf16.mxu0 %v1058
    %1285 = vmatpush1.bf16.msra.mxu0 %v1057
    %1286 = vmatprep.mubr.bf16.mxu0 %v430
    %1287 = vmatmul.mubr.bf16.gmra.mrb[0].mxu0 %v429
    %v1288 = vpop.f32.mrb[0].mxu0
    %v1289 = vadd.f32 %v580, %v1288
    %v1290 = vpop.f32.mrb[0].mxu0
    %v1291 = vadd.f32 %v584, %v1290
    %v1292 = vpop.f32.mrb[0].mxu0
    %v1293 = vpop.f32.mrb[0].mxu0
    %1294 = vdwg.mxu0
    %1295 = vmatprep.subr.bf16.mxu0 0
    %1296 = vmatpush1.bf16.msra.mxu0 %v954
    %1297 = vmatprep.subr.bf16.mxu0 0
    %1298 = vmatpush1.bf16.msra.mxu0 %v961
    %1299 = vmatprep.subr.bf16.mxu0 0
    %1300 = vmatpush1.bf16.msra.mxu0 %v968
    %1301 = vmatprep.subr.bf16.mxu0 0
    %1302 = vmatpush1.bf16.msra.mxu0 %v975
    %1303 = vmatprep.subr.bf16.mxu0 0
    %1304 = vmatpush1.bf16.msra.mxu0 %v982
    %1305 = vmatprep.subr.bf16.mxu0 0
    %1306 = vmatpush1.bf16.msra.mxu0 %v989
    %1307 = vmatprep.subr.bf16.mxu0 0
    %1308 = vmatpush1.bf16.msra.mxu0 %v996
    %1309 = vmatprep.subr.bf16.mxu0 0
    %1310 = vmatpush1.bf16.msra.mxu0 %v1003
    %1311 = vmatprep.subr.bf16.mxu0 0
    %1312 = vmatpush1.bf16.msra.mxu0 %v1010
    %1313 = vmatprep.subr.bf16.mxu0 0
    %1314 = vmatpush1.bf16.msra.mxu0 %v1017
    %1315 = vmatprep.subr.bf16.mxu0 0
    %1316 = vmatpush1.bf16.msra.mxu0 %v1024
    %1317 = vmatprep.subr.bf16.mxu0 0
    %1318 = vmatpush1.bf16.msra.mxu0 %v1031
    %1319 = vmatprep.subr.bf16.mxu0 0
    %1320 = vmatpush1.bf16.msra.mxu0 %v1038
    %1321 = vmatprep.subr.bf16.mxu0 0
    %1322 = vmatpush1.bf16.msra.mxu0 %v1045
    %1323 = vmatprep.subr.bf16.mxu0 0
    %1324 = vmatpush1.bf16.msra.mxu0 %v1052
    %1325 = vmatprep.subr.bf16.mxu0 0
    %1326 = vmatpush1.bf16.msra.mxu0 %v1059
    %1327 = vmatprep.mubr.bf16.mxu0 %v430
    %1328 = vmatmul.mubr.bf16.gmra.mrb[0].mxu0 %v429
    %v1329 = vpop.f32.mrb[0].mxu0
    %v1330 = vadd.f32 %v588, %v1329
    %v1331 = vpop.f32.mrb[0].mxu0
    %v1332 = vpop.f32.mrb[0].mxu0
    %v1333 = vpop.f32.mrb[0].mxu0
    %1334 = vdwg.mxu0
    %v1335 = vtanh.pop %v1207
    %v1336 = vtanh.pop %v1209
    %v1337 = vtanh.pop %v1248
    %v1338 = vtanh.pop %v1250
    %v1339 = vtanh.pop %v1289
    %v1340 = vtanh.pop %v1291
    %v1341 = vtanh.pop %v1330
    %v1342 = vpack.c.bf16 %v1335, %v1335
    %v1343 = vpack.c.bf16 %v1336, %v1336
    %v1344 = vpack.c.bf16 %v1337, %v1337
    %v1345 = vpack.c.bf16 %v1338, %v1338
    %v1346 = vpack.c.bf16 %v1339, %v1339
    %v1347 = vpack.c.bf16 %v1340, %v1340
    %v1348 = vpack.c.bf16 %v1341, %v1341
    %v1356 = vunpack.c.l.b16 %v1342
    %v1357 = vunpack.c.l.b16 %v1343
    %v1358 = vunpack.c.l.b16 %v1344
    %v1359 = vunpack.c.l.b16 %v1345
    %v1360 = vunpack.c.l.b16 %v1346
    %v1361 = vunpack.c.l.b16 %v1347
    %v1362 = vunpack.c.l.b16 %v1348
    %v1363 = vpack.c.b16 %v1357, %v1356
    %v1364 = vpack.c.b16 %v1359, %v1358
    %v1365 = vpack.c.b16 %v1361, %v1360
    %v1366 = vpack.c.b16 %v1362, %v1362
    %1371 = vst [vmem:[#allocation2] sm:$0xff] %v1363
    %1372 = vst [vmem:[#allocation2 + $0x8] sm:$0xff] %v1364
    %1373 = vst [vmem:[#allocation2 + $0x10] sm:$0xff] %v1365
    %vm1374 = vcmask 125952
    %1375 = vst.msk [vmem:[#allocation2 + $0x18] sm:$0xf] %vm1374, %v1366
    // Predicated region
    $region30: #{tpu_custom_call.1} parent=1 // pred_check
      _
    $region31: #{tpu_custom_call.1} parent=1 // pred_check_branch
      %1377 = sbr.rel (0) target = $region33
    $region32: #{tpu_custom_call.1} parent=1 // pred_region
      %s1379 = ssub.s32 448, 448
      %1380 = vsyncadd [#allocation3], %s1379
      %s1382 = sshll.u32 [#allocation2], 4
      %s1383 = int_to_ptr.vmem [resolvable:$true] %s1382
      %1385 = dma.vmem_to_hbm [thread:$0]  %s1383, 448, %s7, [#allocation3]
    $region33: #{tpu_custom_call.1} parent=1 // pred_fallthru
      _
    // Predicated region
    $region34: #{tpu_custom_call.1} parent=1 // pred_check
      _
    $region35: #{tpu_custom_call.1} parent=1 // pred_check_branch
      %1387 = sbr.rel (0) target = $region37
    $region36: #{tpu_custom_call.1} parent=1 // pred_region
      %1388 = dma.done [#allocation3], 448
    $region37: #{tpu_custom_call.1} parent=1 // pred_fallthru
      _
    %1389 = vsyncpa [#allocation3], 1

</llo_original>
